<compile_context>
chip_gen: v7x
topology: tpu7x:2x2x1
jax: 0.10.0
libtpu: 0.0.40
codegen_flags: <defaults>
</compile_context>

<pallas_src>
import functools
import math

import jax
import jax.numpy as jnp
from jax.experimental import pallas as pl
from jax.experimental.pallas import tpu as pltpu


def _round_up(x, m):
    return ((x + m - 1) // m) * m


def _floor_multiple(x, m):
    return max(m, (x // m) * m)


def _vmem_capacity_bytes():
    """Per-core VMEM capacity; conservative 64 MiB fallback (v7x per-TC size)."""
    try:
        info = pltpu.get_tpu_info()
        cap = getattr(info, "vmem_capacity_bytes", None)
        if cap:
            return int(cap)
    except Exception:
        pass
    return 64 * 1024 * 1024


def _fc_kernel_inplace(x_ref, w_ref, b_ref, o_ref, *, activation):
    """f32 output: accumulate straight into the resident output tile.

    The output block index is constant across the K grid axis, so the tile stays
    in VMEM for the whole reduction; no scratch accumulator / epilogue copy.
    """
    k = pl.program_id(2)

    @pl.when(k == 0)
    def _():
        o_ref[...] = jnp.zeros_like(o_ref)

    o_ref[...] += jnp.dot(x_ref[...], w_ref[...],
                          preferred_element_type=jnp.float32)

    @pl.when(k == pl.num_programs(2) - 1)
    def _():
        out = o_ref[...] + b_ref[...]          # bias broadcast over batch rows
        if activation:
            out = jnp.maximum(out, 0.0)
        o_ref[...] = out


def _fc_kernel_scratch(x_ref, w_ref, b_ref, o_ref, acc_ref, *, activation):
    """Low-precision output: accumulate in an f32 VMEM scratch, cast at the end."""
    k = pl.program_id(2)

    @pl.when(k == 0)
    def _():
        acc_ref[...] = jnp.zeros_like(acc_ref)

    acc_ref[...] += jnp.dot(x_ref[...], w_ref[...],
                            preferred_element_type=jnp.float32)

    @pl.when(k == pl.num_programs(2) - 1)
    def _():
        out = acc_ref[...] + b_ref[...]
        if activation:
            out = jnp.maximum(out, 0.0)
        o_ref[...] = out.astype(o_ref.dtype)


def fully_connected(x, weight, bias, *, activation=True,
                    tm_max=512, tn_max=1024, tk_max=2048,
                    compute_dtype=jnp.bfloat16):
    """x: [B, in_features]; weight: [out_features, in_features] (PyTorch layout);
    bias: [out_features]. Returns relu(x @ weight.T + bias) (ReLU optional)."""
    B, in_f = x.shape
    out_f, in_f_w = weight.shape
    assert in_f == in_f_w

    out_dtype = x.dtype
    out_itemsize = jnp.dtype(out_dtype).itemsize
    cdt_itemsize = jnp.dtype(compute_dtype).itemsize
    sub = 16 if cdt_itemsize == 2 else 8       # sublane packing of compute dtype

    # --- tile-size selection -------------------------------------------------
    tm = min(tm_max, _round_up(B, sub))        # sublane-aligned batch tile
    tn = min(tn_max, _round_up(out_f, 128))    # lane-dense output tile
    tk = min(tk_max, _round_up(in_f, 128))     # lane-dense contraction tile

    # Megacore (v7x has 2 TensorCores): if the M grid collapses to one block,
    # keep >=2 blocks along N whenever out_features allows it.
    if _round_up(B, sub) <= tm:                # grid_m == 1
        n_full = _round_up(out_f, 128)
        if n_full >= 256 and n_full // tn < 2:
            tn = min(tn, _round_up(n_full // 2, 128))

    # Shrink tiles to fit the per-core VMEM budget (double-buffered x/W/bias/out
    # pipelines + optional f32 accumulator).  v7x has only 64 MiB per TC.
    vmem_cap = _vmem_capacity_bytes()
    budget = int(vmem_cap * 0.7)

    def footprint(tm_, tn_, tk_):
        acc = 0 if out_dtype == jnp.float32 else tm_ * tn_ * 4
        return (2 * tm_ * tk_ * cdt_itemsize      # x double buffer
                + 2 * tk_ * tn_ * cdt_itemsize    # W double buffer
                + 2 * 8 * tn_ * 4                 # bias double buffer (padded)
                + 2 * tm_ * tn_ * out_itemsize    # output double buffer
                + acc)

    while footprint(tm, tn, tk) > budget and tk > 128:
        tk = _floor_multiple(tk // 2, 128)
    while footprint(tm, tn, tk) > budget and tn > 128:
        tn = _floor_multiple(tn // 2, 128)
    while footprint(tm, tn, tk) > budget and tm > sub:
        tm = _floor_multiple(tm // 2, sub)

    # --- pad once so every tile is full & lane-dense --------------------------
    B_p = _round_up(B, tm)
    N_p = _round_up(out_f, tn)
    K_p = _round_up(in_f, tk)

    x_p = x if (B_p == B and K_p == in_f) else jnp.pad(
        x, ((0, B_p - B), (0, K_p - in_f)))

    # Pre-transpose the weight ONCE in the wrapper (amortized / constant-folded
    # for a jitted parameter): the kernel then contracts W's sublane axis
    # directly, so no per-tile transpose competes with vmatmul pushes.
    w_t = weight.T                                            # [in_f, out_f]
    w_p = w_t if (K_p == in_f and N_p == out_f) else jnp.pad(
        w_t, ((0, K_p - in_f), (0, N_p - out_f)))
    b_p = bias if N_p == out_f else jnp.pad(bias, (0, N_p - out_f))
    b2d = b_p.astype(jnp.float32).reshape(1, N_p)

    # bf16 operands on the MXU, f32 accumulation inside the kernel.
    x_p = x_p.astype(compute_dtype)
    w_p = w_p.astype(compute_dtype)

    grid = (B_p // tm, N_p // tn, K_p // tk)
    grid_m, grid_n, _ = grid

    # bytes_accessed accounts for re-streaming: x is read once per N block,
    # W once per M block (not a single pass of each array).
    cost = pl.CostEstimate(
        flops=2 * B_p * K_p * N_p,
        bytes_accessed=(grid_n * B_p * K_p * cdt_itemsize
                        + grid_m * K_p * N_p * cdt_itemsize
                        + N_p * 4
                        + B_p * N_p * out_itemsize),
        transcendentals=0,
    )

    in_specs = [
        pl.BlockSpec((tm, tk), lambda i, j, k: (i, k)),   # x tile
        pl.BlockSpec((tk, tn), lambda i, j, k: (k, j)),   # W tile (pre-transposed)
        pl.BlockSpec((1, tn), lambda i, j, k: (0, j)),    # bias tile
    ]
    out_spec = pl.BlockSpec((tm, tn), lambda i, j, k: (i, j))

    if out_dtype == jnp.float32:
        kernel = functools.partial(_fc_kernel_inplace, activation=activation)
        scratch_shapes = []
    else:
        kernel = functools.partial(_fc_kernel_scratch, activation=activation)
        scratch_shapes = [pltpu.VMEM((tm, tn), jnp.float32)]

    # TODO(synk): on v5e, consider pipeline_mode=pl.Buffered(3) on the W spec if
    # profiling shows the W DMA stream exposed once bf16 speeds up compute.
    out_p = pl.pallas_call(
        kernel,
        out_shape=jax.ShapeDtypeStruct((B_p, N_p), out_dtype),
        grid_spec=pltpu.PrefetchScalarGridSpec(
            num_scalar_prefetch=0,
            grid=grid,
            in_specs=in_specs,
            out_specs=out_spec,
            scratch_shapes=scratch_shapes,
        ),
        compiler_params=pltpu.CompilerParams(
            dimension_semantics=("parallel", "parallel", "arbitrary"),
            vmem_limit_bytes=budget,
        ),
        cost_estimate=cost,
    )(x_p, w_p, b2d)

    if B_p != B or N_p != out_f:
        out_p = out_p[:B, :out_f]
    return out_p


def xavier_uniform(key, out_features, in_features, dtype=jnp.float32):
    # Matches torch.nn.init.xavier_uniform_ for a Linear weight [out, in].
    limit = math.sqrt(6.0 / (in_features + out_features))
    return jax.random.uniform(
        key, (out_features, in_features), dtype=dtype, minval=-limit, maxval=limit
    )


if __name__ == "__main__":
    in_features = 32
    out_features = 64
    batch = 8

    key = jax.random.PRNGKey(0)
    k_w, k_x = jax.random.split(key)

    weight = xavier_uniform(k_w, out_features, in_features)   # [out, in]
    bias = jnp.zeros((out_features,), jnp.float32)            # zeros, like _init_weights
    x = jax.random.normal(k_x, (batch, in_features), jnp.float32)

    out = fully_connected(x, weight, bias, activation=True)
    out = jax.block_until_ready(out)

    # Sanity check against a plain-JAX reference (tolerance loosened because the
    # kernel runs the matmul in bf16 with f32 accumulation).
    ref = jnp.maximum(x @ weight.T + bias, 0.0)
    assert out.shape == (batch, out_features)
    assert jnp.allclose(out, ref, atol=3e-2, rtol=3e-2)

    print("KERNEL_OK")
</pallas_src>

<mosaic_0001>
module attributes {stable_mosaic.version = 11 : i64} {
  func.func @_fc_kernel_inplace(%arg0: i32, %arg1: i32, %arg2: i32, %arg3: memref<16x128xbf16, #tpu.memory_space<vmem>>, %arg4: memref<128x128xbf16, #tpu.memory_space<vmem>>, %arg5: memref<1x128xf32, #tpu.memory_space<vmem>>, %arg6: memref<16x128xf32, #tpu.memory_space<vmem>>) attributes {dimension_semantics = [#tpu.dimension_semantics<parallel>, #tpu.dimension_semantics<parallel>, #tpu.dimension_semantics<arbitrary>], iteration_bounds = array<i64: 1, 1, 1>, scalar_prefetch = 0 : i64, scratch_operands = 0 : i64, tpu.core_type = #tpu.core_type<tc>, window_params = [{transform_indices = @transform_0, window_bounds = array<i64: 16, 128>}, {transform_indices = @transform_1, window_bounds = array<i64: 128, 128>}, {transform_indices = @transform_2, window_bounds = array<i64: 1, 128>}, {transform_indices = @transform_3, window_bounds = array<i64: 16, 128>}]} {
    %c0_i32 = arith.constant 0 : i32
    %0 = arith.cmpi eq, %arg2, %c0_i32 : i32
    %1 = arith.extui %0 : i1 to i32
    %c0_i32_0 = arith.constant 0 : i32
    %2 = arith.cmpi ne, %1, %c0_i32_0 : i32
    scf.if %2 {
      %cst_10 = arith.constant 0.000000e+00 : f32
      %12 = vector.broadcast %cst_10 : f32 to vector<16x128xf32>
      %c0_11 = arith.constant 0 : index
      %c0_12 = arith.constant 0 : index
      %13 = vector.load %arg6[%c0_11, %c0_12] : memref<16x128xf32, #tpu.memory_space<vmem>>, vector<16x128xf32>
      tpu.vector_store %arg6[%c0_11, %c0_12], %12 {strides = array<i32>} : memref<16x128xf32, #tpu.memory_space<vmem>>, vector<16x128xf32>,
    } else {
    }
    %c0 = arith.constant 0 : index
    %c0_1 = arith.constant 0 : index
    %3 = vector.load %arg6[%c0, %c0_1] : memref<16x128xf32, #tpu.memory_space<vmem>>, vector<16x128xf32>
    %c0_2 = arith.constant 0 : index
    %c0_3 = arith.constant 0 : index
    %4 = vector.load %arg3[%c0_2, %c0_3] : memref<16x128xbf16, #tpu.memory_space<vmem>>, vector<16x128xbf16>
    %c0_4 = arith.constant 0 : index
    %c0_5 = arith.constant 0 : index
    %5 = vector.load %arg4[%c0_4, %c0_5] : memref<128x128xbf16, #tpu.memory_space<vmem>>, vector<128x128xbf16>
    %cst = arith.constant dense<0.000000e+00> : vector<16x128xf32>
    %6 = tpu.matmul %4, %5, %cst {dimension_numbers = #tpu.dot_dimension_numbers<[1], [0], [0], [1], [0, 0, 1, 1], [], []>} : vector<16x128xbf16>, vector<128x128xbf16>, vector<16x128xf32> -> vector<16x128xf32>
    %7 = arith.addf %3, %6 : vector<16x128xf32>
    %c0_6 = arith.constant 0 : index
    %c0_7 = arith.constant 0 : index
    %8 = vector.load %arg6[%c0_6, %c0_7] : memref<16x128xf32, #tpu.memory_space<vmem>>, vector<16x128xf32>
    tpu.vector_store %arg6[%c0_6, %c0_7], %7 {strides = array<i32>} : memref<16x128xf32, #tpu.memory_space<vmem>>, vector<16x128xf32>,
    %c0_i32_8 = arith.constant 0 : i32
    %9 = arith.cmpi eq, %arg2, %c0_i32_8 : i32
    %10 = arith.extui %9 : i1 to i32
    %c0_i32_9 = arith.constant 0 : i32
    %11 = arith.cmpi ne, %10, %c0_i32_9 : i32
    scf.if %11 {
      %c0_10 = arith.constant 0 : index
      %c0_11 = arith.constant 0 : index
      %12 = vector.load %arg6[%c0_10, %c0_11] : memref<16x128xf32, #tpu.memory_space<vmem>>, vector<16x128xf32>
      %c0_12 = arith.constant 0 : index
      %c0_13 = arith.constant 0 : index
      %13 = vector.load %arg5[%c0_12, %c0_13] : memref<1x128xf32, #tpu.memory_space<vmem>>, vector<1x128xf32>
      %14 = vector.broadcast %13 : vector<1x128xf32> to vector<16x128xf32>
      %15 = arith.addf %12, %14 : vector<16x128xf32>
      %cst_14 = arith.constant 0.000000e+00 : f32
      %16 = vector.broadcast %cst_14 : f32 to vector<16x128xf32>
      %17 = arith.maximumf %15, %16 : vector<16x128xf32>
      %c0_15 = arith.constant 0 : index
      %c0_16 = arith.constant 0 : index
      %18 = vector.load %arg6[%c0_15, %c0_16] : memref<16x128xf32, #tpu.memory_space<vmem>>, vector<16x128xf32>
      tpu.vector_store %arg6[%c0_15, %c0_16], %17 {strides = array<i32>} : memref<16x128xf32, #tpu.memory_space<vmem>>, vector<16x128xf32>,
    } else {
    }
    return
  }
  func.func @transform_0(%arg0: i32, %arg1: i32, %arg2: i32) -> (i32, i32) {
    %c0_i32 = arith.constant 0 : i32
    return %arg0, %arg2 : i32, i32
  }
  func.func @transform_1(%arg0: i32, %arg1: i32, %arg2: i32) -> (i32, i32) {
    %c0_i32 = arith.constant 0 : i32
    return %arg2, %arg1 : i32, i32
  }
  func.func @transform_2(%arg0: i32, %arg1: i32, %arg2: i32) -> (i32, i32) {
    %c0_i32 = arith.constant 0 : i32
    %c0_i32_0 = arith.constant 0 : i32
    return %c0_i32, %arg1 : i32, i32
  }
  func.func @transform_3(%arg0: i32, %arg1: i32, %arg2: i32) -> (i32, i32) {
    %c0_i32 = arith.constant 0 : i32
    return %arg0, %arg1 : i32, i32
  }
}

</mosaic_0001>

<llo_original>
// kernel: tpu_custom_call.1
$region0: #{tpu_custom_call.1}
  #allocation0 [shape = 'u32[]', space=smem, size = 0x4, offset = 0x4, fixed_abs, tag = 'smem constant byte address 0x4 - core index']
  #allocation1 [shape = 'u32[144,128]{1,0:T(1,128)}', space=vmem, size = 0x12000, scoped, tag = 'internal scratch']
  %s0 = inlined_call_operand.hbm [shape: bf16[16,128], index: 0, kind: input, shape index: {}]
  %s1 = inlined_call_operand.hbm [shape: bf16[128,128], index: 1, kind: input, shape index: {}]
  %s2 = inlined_call_operand.vmem [shape: f32[1,128], index: 2, kind: input, shape index: {}]
  %s3 = inlined_call_operand.hbm [shape: f32[16,128], index: 3, kind: output, shape index: {}]
  %s4 = sld [smem:[#allocation0]]
  $region38: #{tpu_custom_call.1} parent=0
    _
  %s6 = ssub.s32 1, %s4
  %s7 = scalar_select 0, %s6, %s4
  $region1: #{tpu_custom_call.1} parent=0
    #allocation2 [shape = 'u8[4096]{0}', space=vmem, size = 0x1000, scoped, tag = 'input window, operand 0, single buffered']
    #allocation3 [shape = 's32[1]{0}', space=sflag, size = 0x4, scoped, tag = 'scoped memory for tpu_custom_call.1']
    #allocation4 [shape = 's32[1]{0}', space=sflag, size = 0x4, scoped, tag = 'scoped memory for tpu_custom_call.1']
    #allocation5 [shape = 'u8[32768]{0}', space=vmem, size = 0x8000, scoped, tag = 'input window, operand 1, single buffered']
    #allocation6 [shape = 's32[1]{0}', space=sflag, size = 0x4, scoped, tag = 'scoped memory for tpu_custom_call.1']
    #allocation7 [shape = 'u8[8192]{0}', space=vmem, size = 0x2000, scoped, tag = 'output window, operand 0, single buffered']
    %8 = vsyncpa [#allocation3], 0
    %9 = vsyncpa [#allocation6], 0
    %10 = vsyncpa [#allocation4], 0
    // Predicated region
    $region2: #{tpu_custom_call.1} parent=1 // pred_check
      _
    $region3: #{tpu_custom_call.1} parent=1 // pred_check_branch
      %12 = sbr.rel (0) target = $region5
    $region4: #{tpu_custom_call.1} parent=1 // pred_region
      %s14 = ssub.s32 128, 128
      %15 = vsyncadd [#allocation3], %s14
      %s16 = sshll.u32 [#allocation2], 4
      %s17 = int_to_ptr.vmem [resolvable:$true] %s16
      %22 = dma.hbm_to_vmem [thread:$0]  %s0, 128, %s17, [#allocation3], 64, 64, 4
    $region5: #{tpu_custom_call.1} parent=1 // pred_fallthru
      _
    // Predicated region
    $region6: #{tpu_custom_call.1} parent=1 // pred_check
      _
    $region7: #{tpu_custom_call.1} parent=1 // pred_check_branch
      %24 = sbr.rel (0) target = $region9
    $region8: #{tpu_custom_call.1} parent=1 // pred_region
      %s26 = ssub.s32 1024, 1024
      %27 = vsyncadd [#allocation6], %s26
      %s28 = sshll.u32 [#allocation5], 4
      %s29 = int_to_ptr.vmem [resolvable:$true] %s28
      %34 = dma.hbm_to_vmem [thread:$0]  %s1, 1024, %s29, [#allocation6], 64, 64, 4
    $region9: #{tpu_custom_call.1} parent=1 // pred_fallthru
      _
    // Predicated region
    $region10: #{tpu_custom_call.1} parent=1 // pred_check
      _
    $region11: #{tpu_custom_call.1} parent=1 // pred_check_branch
      %36 = sbr.rel (0) target = $region13
    $region12: #{tpu_custom_call.1} parent=1 // pred_region
      _
    $region13: #{tpu_custom_call.1} parent=1 // pred_fallthru
      _
    // Predicated region
    $region14: #{tpu_custom_call.1} parent=1 // pred_check
      _
    $region15: #{tpu_custom_call.1} parent=1 // pred_check_branch
      %38 = sbr.rel (0) target = $region17
    $region16: #{tpu_custom_call.1} parent=1 // pred_region
      %39 = dma.done [#allocation3], 128
    $region17: #{tpu_custom_call.1} parent=1 // pred_fallthru
      _
    // Predicated region
    $region18: #{tpu_custom_call.1} parent=1 // pred_check
      _
    $region19: #{tpu_custom_call.1} parent=1 // pred_check_branch
      %41 = sbr.rel (0) target = $region21
    $region20: #{tpu_custom_call.1} parent=1 // pred_region
      %42 = dma.done [#allocation6], 1024
    $region21: #{tpu_custom_call.1} parent=1 // pred_fallthru
      _
    %p44 = scmp.eq.s32.totalorder 0, 0
    // Predicated region
    $region22: #{tpu_custom_call.1} parent=1 // pred_check
      %p45 = pneg %p44
    $region23: #{tpu_custom_call.1} parent=1 // pred_check_branch
      %47 = sbr.rel (%p45) target = $region25
    $region24: #{tpu_custom_call.1} parent=1 // pred_region
      %48 = vst [vmem:[#allocation7] sm:$0xff] 0.0
      %49 = vst [vmem:[#allocation7 + $0x8] sm:$0xff] 0.0
    $region25: #{tpu_custom_call.1} parent=1 // pred_fallthru
      _
    %v50 = vld [vmem:[#allocation7] sm:$0xff]
    %v51 = vld [vmem:[#allocation7 + $0x8] sm:$0xff]
    %v52 = vld [vmem:[#allocation2] sm:$0xf]
    %v53 = vld [vmem:[#allocation2 + $0x4] sm:$0xf]
    %v54 = vld [vmem:[#allocation5] sm:$0xf]
    %v55 = vld [vmem:[#allocation5 + $0x4] sm:$0xf]
    %v56 = vld [vmem:[#allocation5 + $0x8] sm:$0xf]
    %v57 = vld [vmem:[#allocation5 + $0xc] sm:$0xf]
    %v58 = vld [vmem:[#allocation5 + $0x10] sm:$0xf]
    %v59 = vld [vmem:[#allocation5 + $0x14] sm:$0xf]
    %v60 = vld [vmem:[#allocation5 + $0x18] sm:$0xf]
    %v61 = vld [vmem:[#allocation5 + $0x1c] sm:$0xf]
    %v62 = vld [vmem:[#allocation5 + $0x20] sm:$0xf]
    %v63 = vld [vmem:[#allocation5 + $0x24] sm:$0xf]
    %v64 = vld [vmem:[#allocation5 + $0x28] sm:$0xf]
    %v65 = vld [vmem:[#allocation5 + $0x2c] sm:$0xf]
    %v66 = vld [vmem:[#allocation5 + $0x30] sm:$0xf]
    %v67 = vld [vmem:[#allocation5 + $0x34] sm:$0xf]
    %v68 = vld [vmem:[#allocation5 + $0x38] sm:$0xf]
    %v69 = vld [vmem:[#allocation5 + $0x3c] sm:$0xf]
    %v72 = vunpack.c.l.b16 %v52
    %v73 = vunpack.c.l.b16 %v53
    %v74 = vpack.c.b16 %v73, %v72
    %v92 = vunpack.c.l.b16 %v54
    %v93 = vunpack.c.l.b16 %v55
    %v94 = vunpack.c.l.b16 %v56
    %v95 = vunpack.c.l.b16 %v57
    %v96 = vunpack.c.l.b16 %v58
    %v97 = vunpack.c.l.b16 %v59
    %v98 = vunpack.c.l.b16 %v60
    %v99 = vunpack.c.l.b16 %v61
    %v100 = vunpack.c.l.b16 %v62
    %v101 = vunpack.c.l.b16 %v63
    %v102 = vunpack.c.l.b16 %v64
    %v103 = vunpack.c.l.b16 %v65
    %v104 = vunpack.c.l.b16 %v66
    %v105 = vunpack.c.l.b16 %v67
    %v106 = vunpack.c.l.b16 %v68
    %v107 = vunpack.c.l.b16 %v69
    %v108 = vpack.c.b16 %v93, %v92
    %v109 = vpack.c.b16 %v95, %v94
    %v110 = vpack.c.b16 %v97, %v96
    %v111 = vpack.c.b16 %v99, %v98
    %v112 = vpack.c.b16 %v101, %v100
    %v113 = vpack.c.b16 %v103, %v102
    %v114 = vpack.c.b16 %v105, %v104
    %v115 = vpack.c.b16 %v107, %v106
    %124 = vmatprep.subr.bf16.mxu0 0
    %125 = vmatpush1.bf16.msra.mxu0 %v108
    %126 = vmatprep.subr.bf16.mxu0 0
    %127 = vmatpush1.bf16.msra.mxu0 %v109
    %128 = vmatprep.subr.bf16.mxu0 0
    %129 = vmatpush1.bf16.msra.mxu0 %v110
    %130 = vmatprep.subr.bf16.mxu0 0
    %131 = vmatpush1.bf16.msra.mxu0 %v111
    %132 = vmatprep.subr.bf16.mxu0 0
    %133 = vmatpush1.bf16.msra.mxu0 %v112
    %134 = vmatprep.subr.bf16.mxu0 0
    %135 = vmatpush1.bf16.msra.mxu0 %v113
    %136 = vmatprep.subr.bf16.mxu0 0
    %137 = vmatpush1.bf16.msra.mxu0 %v114
    %138 = vmatprep.subr.bf16.mxu0 0
    %139 = vmatpush1.bf16.msra.mxu0 %v115
    %140 = vmatprep.subr.bf16.mxu0 0
    %141 = vmatpush1.bf16.msra.mxu0 0
    %142 = vmatprep.subr.bf16.mxu0 0
    %143 = vmatpush1.bf16.msra.mxu0 0
    %144 = vmatprep.subr.bf16.mxu0 0
    %145 = vmatpush1.bf16.msra.mxu0 0
    %146 = vmatprep.subr.bf16.mxu0 0
    %147 = vmatpush1.bf16.msra.mxu0 0
    %148 = vmatprep.subr.bf16.mxu0 0
    %149 = vmatpush1.bf16.msra.mxu0 0
    %150 = vmatprep.subr.bf16.mxu0 0
    %151 = vmatpush1.bf16.msra.mxu0 0
    %152 = vmatprep.subr.bf16.mxu0 0
    %153 = vmatpush1.bf16.msra.mxu0 0
    %154 = vmatprep.subr.bf16.mxu0 0
    %155 = vmatpush1.bf16.msra.mxu0 0
    %156 = vmatprep.mubr.bf16.mxu0 0
    %157 = vmatmul.mubr.bf16.gmra.mrb[0].mxu0 %v74
    %v158 = vpop.f32.mrb[0].mxu0
    %v159 = vadd.f32 0.0, %v158
    %v160 = vpop.f32.mrb[0].mxu0
    %v161 = vpop.f32.mrb[0].mxu0
    %v162 = vadd.f32 0.0, %v161
    %v163 = vpop.f32.mrb[0].mxu0
    %164 = vdwg.mxu0
    %v165 = vadd.f32 %v50, %v159
    %v166 = vadd.f32 %v51, %v162
    %167 = vst [vmem:[#allocation7] sm:$0xff] %v165
    %168 = vst [vmem:[#allocation7 + $0x8] sm:$0xff] %v166
    // Predicated region
    $region26: #{tpu_custom_call.1} parent=1 // pred_check
      %p169 = pneg %p44
    $region27: #{tpu_custom_call.1} parent=1 // pred_check_branch
      %171 = sbr.rel (%p169) target = $region29
    $region28: #{tpu_custom_call.1} parent=1 // pred_region
      %v172 = vld [vmem:[#allocation7] sm:$0xff]
      %v173 = vld [vmem:[#allocation7 + $0x8] sm:$0xff]
      %v174 = vld [vmem:[%s2] sm:$0x1]
      %v176 = vlaneseq
      %v177 = vshrl.u32 %v176, 7
      %v178 = vsub.s32 0, %v177
      %v179 = vrot.slane %v174, %v178
      %v181 = vadd.f32 %v172, %v179
      %v182 = vadd.f32 %v173, %v179
      %v183 = vmax.f32 %v181, 0.0
      %v184 = vmax.f32 %v182, 0.0
      %185 = vst [vmem:[#allocation7] sm:$0xff] %v183
      %186 = vst [vmem:[#allocation7 + $0x8] sm:$0xff] %v184
    $region29: #{tpu_custom_call.1} parent=1 // pred_fallthru
      _
    // Predicated region
    $region30: #{tpu_custom_call.1} parent=1 // pred_check
      _
    $region31: #{tpu_custom_call.1} parent=1 // pred_check_branch
      %188 = sbr.rel (0) target = $region33
    $region32: #{tpu_custom_call.1} parent=1 // pred_region
      %s190 = ssub.s32 256, 256
      %191 = vsyncadd [#allocation4], %s190
      %s192 = sshll.u32 [#allocation7], 4
      %s193 = int_to_ptr.vmem [resolvable:$true] %s192
      %198 = dma.vmem_to_hbm [thread:$0]  %s193, 256, %s3, [#allocation4], 128, 128, 8
    $region33: #{tpu_custom_call.1} parent=1 // pred_fallthru
      _
    // Predicated region
    $region34: #{tpu_custom_call.1} parent=1 // pred_check
      _
    $region35: #{tpu_custom_call.1} parent=1 // pred_check_branch
      %200 = sbr.rel (0) target = $region37
    $region36: #{tpu_custom_call.1} parent=1 // pred_region
      %201 = dma.done [#allocation4], 256
    $region37: #{tpu_custom_call.1} parent=1 // pred_fallthru
      _
    %202 = vsyncpa [#allocation3], 1
    %203 = vsyncpa [#allocation6], 1
    %204 = vsyncpa [#allocation4], 1

</llo_original>
